<compile_context>
chip_gen: v7x
topology: tpu7x:2x2x1
jax: 0.10.0
libtpu: 0.0.40
codegen_flags: <defaults>
</compile_context>

<pallas_src>
import jax
import jax.numpy as jnp
from jax.experimental import pallas as pl
from jax.experimental.pallas import tpu as pltpu

_LANES = 128
_SUBLANES = 8


def _round_up(x, m):
    return ((x + m - 1) // m) * m


def _pick_point_tile(n):
    """Point-tile size: big tiles amortize the ~0.35 us/step grid overhead and
    keep the 512-lane output DMAs dense, while staying far below the 32 MiB
    scoped-VMEM budget (bf16 token tile at tn=2048 is 2 MiB, 4 MiB buffered,
    plus ~6 MiB of f32 intermediates)."""
    for cand in (2048, 1024, 512, 256, 128):
        if n % cand == 0:
            return cand
    if n <= 2048:
        return _round_up(n, _SUBLANES)   # single (zero-padded) block
    return 1024                          # pad N up to a multiple of 1024


# ----------------------------------------------------------------------------
# Fused encoder + max-pool + token projection
# ----------------------------------------------------------------------------
def encode_and_project(pc, w1, b1, proj, *, with_tokens=True,
                       token_dtype=jnp.bfloat16):
    """Returns (pc_embed [B, 512] f32, patch_embed [B, N, 512] token_dtype
    or None if with_tokens=False)."""
    B, N, C = pc.shape
    F = w1.shape[1]
    D = proj.shape[1]

    # Wrapper-side padding: features to full 128-lane vregs / MXU width,
    # point channels to a sublane-aligned K=8, points to a tile multiple.
    Fp = _round_up(max(F, _LANES), _LANES)
    Cp = _SUBLANES
    tn = _pick_point_tile(N)
    n_blocks = pl.cdiv(N, tn)
    Np = n_blocks * tn
    # Split point blocks into (outer "parallel", inner "arbitrary") so v7x's
    # two TensorCores have work even when B == 1 (no-op on v5e/v6e).
    n_outer = 2 if (n_blocks % 2 == 0) else 1
    n_inner = n_blocks // n_outer
    need_mask = Np != N

    f32 = jnp.float32
    pc_p = jnp.pad(pc.astype(f32), ((0, 0), (0, Np - N), (0, Cp - C)))
    w1_p = jnp.pad(w1.astype(f32), ((0, Cp - C), (0, Fp - F)))
    b1_p = jnp.pad(b1.reshape(1, -1).astype(f32), ((0, 0), (0, Fp - F)))
    proj_f32 = jnp.pad(proj.astype(f32), ((0, Fp - F), (0, 0)))
    proj_bf16 = proj_f32.astype(jnp.bfloat16)   # bf16 MXU operand in-kernel

    # ------------------------------------------------------------ kernels ---
    def _point_features(pc_ref, w1_ref, b1_ref):
        # Per-point linear on the MXU (K=8, zero-padded from 3).  Keeping the
        # contraction on the MXU avoids the lane-sparse column slices and
        # cross-lane broadcasts of the (tn, 3) VPU formulation and leaves h
        # in the layout wanted by the token projection and the max-pool.
        h = jnp.dot(pc_ref[0], w1_ref[...], preferred_element_type=jnp.float32)
        return jnp.maximum(h + b1_ref[...], 0.0)           # (tn, Fp) f32

    def _update_partial_max(h, maxp_ref):
        hm = h
        if need_mask:
            blk = pl.program_id(1) * n_inner + pl.program_id(2)
            pt = jax.lax.broadcasted_iota(jnp.int32, (tn, 1), 0) + blk * tn
            # 0 is a valid max identity here because h = ReLU(...) >= 0.
            hm = jnp.where(pt < N, h, 0.0)
        # Reduce only down to 8 sublanes (vreg-wise VPU max, no XLU reduce);
        # the tiny cross-sublane / cross-chunk max is finished in XLA.
        tile_max = jnp.max(hm.reshape(tn // _SUBLANES, _SUBLANES, Fp), axis=0)

        @pl.when(pl.program_id(2) == 0)
        def _():
            maxp_ref[...] = jnp.zeros_like(maxp_ref)        # ReLU(h) >= 0

        maxp_ref[...] = jnp.maximum(
            maxp_ref[...], tile_max.reshape(1, 1, _SUBLANES, Fp))

    def _fused_kernel(pc_ref, w1_ref, b1_ref, proj_ref, maxp_ref, patch_ref):
        h = _point_features(pc_ref, w1_ref, b1_ref)
        _update_partial_max(h, maxp_ref)
        # Fused token projection: bf16 MXU operands, f32 accumulation,
        # lane-dense (tn, 512) bf16 writeback (halves the HBM-bound output).
        patch_ref[0] = jnp.dot(
            h.astype(jnp.bfloat16), proj_ref[...],
            preferred_element_type=jnp.float32).astype(patch_ref.dtype)

    def _global_kernel(pc_ref, w1_ref, b1_ref, maxp_ref):
        # 'global' path: no projection input and no [B, N, 512] token write.
        h = _point_features(pc_ref, w1_ref, b1_ref)
        _update_partial_max(h, maxp_ref)

    # ----------------------------------------------------------- pallas -----
    grid = (B, n_outer, n_inner)
    pc_spec = pl.BlockSpec((1, tn, Cp),
                           lambda b, no, ni: (b, no * n_inner + ni, 0))
    w1_spec = pl.BlockSpec((Cp, Fp), lambda b, no, ni: (0, 0))
    b1_spec = pl.BlockSpec((1, Fp), lambda b, no, ni: (0, 0))
    proj_spec = pl.BlockSpec((Fp, D), lambda b, no, ni: (0, 0))
    maxp_spec = pl.BlockSpec((1, 1, _SUBLANES, Fp),
                             lambda b, no, ni: (b, no, 0, 0))
    patch_spec = pl.BlockSpec((1, tn, D),
                              lambda b, no, ni: (b, no * n_inner + ni, 0))

    maxp_shape = jax.ShapeDtypeStruct((B, n_outer, _SUBLANES, Fp), f32)
    comp = pltpu.CompilerParams(
        dimension_semantics=("parallel", "parallel", "arbitrary"),
        vmem_limit_bytes=32 * 1024 * 1024,   # safe on v5e/v6e/v7x; tiles ~10 MiB
    )

    bytes_weights = (Cp * Fp + Fp) * 4
    bytes_pc = B * Np * Cp * 4
    bytes_maxp = B * n_outer * _SUBLANES * Fp * 4
    flops_pts = 2 * B * Np * Cp * Fp

    if with_tokens:
        tok_bytes = jnp.dtype(token_dtype).itemsize
        maxp, patch = pl.pallas_call(
            _fused_kernel,
            out_shape=(maxp_shape,
                       jax.ShapeDtypeStruct((B, Np, D), token_dtype)),
            grid=grid,
            in_specs=[pc_spec, w1_spec, b1_spec, proj_spec],
            out_specs=(maxp_spec, patch_spec),
            compiler_params=comp,
            cost_estimate=pl.CostEstimate(
                flops=flops_pts + 2 * B * Np * Fp * D,
                transcendentals=0,
                bytes_accessed=(bytes_pc + bytes_weights + Fp * D * 2
                                + bytes_maxp + B * Np * D * tok_bytes)),
        )(pc_p, w1_p, b1_p, proj_bf16)
    else:
        maxp = pl.pallas_call(
            _global_kernel,
            out_shape=maxp_shape,
            grid=grid,
            in_specs=[pc_spec, w1_spec, b1_spec],
            out_specs=maxp_spec,
            compiler_params=comp,
            cost_estimate=pl.CostEstimate(
                flops=flops_pts, transcendentals=0,
                bytes_accessed=bytes_pc + bytes_weights + bytes_maxp),
        )(pc_p, w1_p, b1_p)
        patch = None

    # Hoisted global projection: finish the tiny max over (chunk, sublane)
    # groups and do a single (B, Fp) @ (Fp, 512) f32 matmul in XLA instead of
    # an M=1 MXU dot on every batch's critical tail inside the kernel.
    pc_feat = jnp.max(maxp, axis=(1, 2))                    # (B, Fp) f32
    pc_embed = pc_feat @ proj_f32                           # (B, 512) f32

    if patch is not None and Np != N:
        patch = patch[:, :N, :]
    return pc_embed, patch


# ----------------------------------------------------------------------------
# ULIP forward (mirrors the PyTorch module's cache_type branches)
# ----------------------------------------------------------------------------
def ulip_forward(pc, params, cache_type="hierarchical"):
    w1, b1, proj = params["w1"], params["b1"], params["pc_projection"]

    if cache_type == "global":
        # Never materializes the [B, N, 512] token tensor at all.
        pc_embed, _ = encode_and_project(pc, w1, b1, proj, with_tokens=False)
        return pc_embed

    pc_embed, patch_embed = encode_and_project(pc, w1, b1, proj,
                                               with_tokens=True)
    if cache_type == "local":
        return patch_embed
    if cache_type == "hierarchical":
        return pc_embed, patch_embed
    # Fall-through ("all_patches"): the synthetic encoder exposes identical
    # per-point features for all_patches and patch_centers; reuse one
    # projection instead of projecting identical data twice.
    # TODO(synk): real PointTransformer returns distinct all_patches / patch_centers.
    return pc_embed, patch_embed, patch_embed


# ----------------------------------------------------------------------------
# Pure-JAX reference for validation
# ----------------------------------------------------------------------------
def ulip_forward_ref(pc, params, cache_type="hierarchical"):
    w1, b1, proj = params["w1"], params["b1"], params["pc_projection"]
    h = jnp.maximum(jnp.einsum("bnc,cf->bnf", pc, w1) + b1.reshape(1, 1, -1),
                    0.0)
    pc_feat = jnp.max(h, axis=1)
    if cache_type == "global":
        return pc_feat @ proj
    if cache_type == "local":
        return h @ proj
    if cache_type == "hierarchical":
        return pc_feat @ proj, h @ proj
    return pc_feat @ proj, h @ proj, h @ proj


if __name__ == "__main__":
    PC_FEAT_DIM, PROJ_DIM = 32, 512

    key = jax.random.PRNGKey(0)
    k_w1, k_b1, k_proj, k_pc = jax.random.split(key, 4)
    params = {
        "w1": jax.random.normal(k_w1, (3, PC_FEAT_DIM), dtype=jnp.float32) * 0.1,
        "b1": jax.random.normal(k_b1, (1, PC_FEAT_DIM), dtype=jnp.float32) * 0.1,
        "pc_projection": jax.random.normal(
            k_proj, (PC_FEAT_DIM, PROJ_DIM), dtype=jnp.float32) * 0.05,
    }

    # (B, N) configs: single tile; padded + masked tile; multi-block with the
    # outer/inner point split (n_outer=2, n_inner=2) at B=1.
    configs = [(2, 16), (2, 20), (1, 8192)]
    for B, N in configs:
        pc = jax.random.normal(jax.random.fold_in(k_pc, N), (B, N, 3),
                               dtype=jnp.float32)
        for cache_type in ("hierarchical", "global"):
            out = ulip_forward(pc, params, cache_type)
            out = jax.tree_util.tree_map(jax.block_until_ready, out)
            ref = ulip_forward_ref(pc, params, cache_type)
            for o, r in zip(jax.tree_util.tree_leaves(out),
                            jax.tree_util.tree_leaves(ref)):
                assert o.shape == r.shape, (cache_type, o.shape, r.shape)
                assert jnp.allclose(o.astype(jnp.float32), r,
                                    rtol=2e-2, atol=5e-3), \
                    f"mismatch vs reference (cache_type={cache_type}, B={B}, N={N})"

    print("KERNEL_OK")
</pallas_src>

<mosaic_0001>
module attributes {stable_mosaic.version = 11 : i64} {
  func.func @_fused_kernel(%arg0: i32, %arg1: i32, %arg2: i32, %arg3: memref<1x16x8xf32, #tpu.memory_space<vmem>>, %arg4: memref<8x128xf32, #tpu.memory_space<vmem>>, %arg5: memref<1x128xf32, #tpu.memory_space<vmem>>, %arg6: memref<128x512xbf16, #tpu.memory_space<vmem>>, %arg7: memref<1x1x8x128xf32, #tpu.memory_space<vmem>>, %arg8: memref<1x16x512xbf16, #tpu.memory_space<vmem>>) attributes {dimension_semantics = [#tpu.dimension_semantics<parallel>, #tpu.dimension_semantics<parallel>, #tpu.dimension_semantics<arbitrary>], iteration_bounds = array<i64: 2, 1, 1>, scalar_prefetch = 0 : i64, scratch_operands = 0 : i64, tpu.core_type = #tpu.core_type<tc>, window_params = [{transform_indices = @transform_0, window_bounds = array<i64: 1, 16, 8>}, {pipeline_mode = #tpu.pipeline_mode<synchronous>, transform_indices = @transform_1, window_bounds = array<i64: 8, 128>}, {pipeline_mode = #tpu.pipeline_mode<synchronous>, transform_indices = @transform_2, window_bounds = array<i64: 1, 128>}, {pipeline_mode = #tpu.pipeline_mode<synchronous>, transform_indices = @transform_3, window_bounds = array<i64: 128, 512>}, {transform_indices = @transform_4, window_bounds = array<i64: 1, 1, 8, 128>}, {transform_indices = @transform_5, window_bounds = array<i64: 1, 16, 512>}]} {
    %c0 = arith.constant 0 : index
    %c0_0 = arith.constant 0 : index
    %c0_1 = arith.constant 0 : index
    %0 = vector.load %arg3[%c0, %c0_0, %c0_1] : memref<1x16x8xf32, #tpu.memory_space<vmem>>, vector<1x16x8xf32>
    %1 = vector.shape_cast %0 : vector<1x16x8xf32> to vector<16x8xf32>
    %c0_2 = arith.constant 0 : index
    %c0_3 = arith.constant 0 : index
    %2 = vector.load %arg4[%c0_2, %c0_3] : memref<8x128xf32, #tpu.memory_space<vmem>>, vector<8x128xf32>
    %cst = arith.constant dense<0.000000e+00> : vector<16x128xf32>
    %3 = tpu.matmul %1, %2, %cst {dimension_numbers = #tpu.dot_dimension_numbers<[1], [0], [0], [1], [0, 0, 1, 1], [], []>} : vector<16x8xf32>, vector<8x128xf32>, vector<16x128xf32> -> vector<16x128xf32>
    %c0_4 = arith.constant 0 : index
    %c0_5 = arith.constant 0 : index
    %4 = vector.load %arg5[%c0_4, %c0_5] : memref<1x128xf32, #tpu.memory_space<vmem>>, vector<1x128xf32>
    %5 = vector.broadcast %4 : vector<1x128xf32> to vector<16x128xf32>
    %6 = arith.addf %3, %5 : vector<16x128xf32>
    %cst_6 = arith.constant 0.000000e+00 : f32
    %7 = vector.broadcast %cst_6 : f32 to vector<16x128xf32>
    %8 = arith.maximumf %6, %7 : vector<16x128xf32>
    %9 = vector.shape_cast %8 : vector<16x128xf32> to vector<2x8x128xf32>
    %cst_7 = arith.constant dense<0xFF800000> : vector<8x128xf32>
    %10 = vector.multi_reduction <maximumf>, %9, %cst_7 [0] : vector<2x8x128xf32> to vector<8x128xf32>
    %c0_i32 = arith.constant 0 : i32
    %11 = arith.cmpi eq, %arg2, %c0_i32 : i32
    %12 = arith.extui %11 : i1 to i32
    %c0_i32_8 = arith.constant 0 : i32
    %13 = arith.cmpi ne, %12, %c0_i32_8 : i32
    scf.if %13 {
      %cst_23 = arith.constant 0.000000e+00 : f32
      %25 = vector.broadcast %cst_23 : f32 to vector<1x1x8x128xf32>
      %c0_24 = arith.constant 0 : index
      %c0_25 = arith.constant 0 : index
      %c0_26 = arith.constant 0 : index
      %c0_27 = arith.constant 0 : index
      %26 = vector.load %arg7[%c0_24, %c0_25, %c0_26, %c0_27] : memref<1x1x8x128xf32, #tpu.memory_space<vmem>>, vector<1x1x8x128xf32>
      tpu.vector_store %arg7[%c0_24, %c0_25, %c0_26, %c0_27], %25 {strides = array<i32>} : memref<1x1x8x128xf32, #tpu.memory_space<vmem>>, vector<1x1x8x128xf32>,
    } else {
    }
    %c0_9 = arith.constant 0 : index
    %c0_10 = arith.constant 0 : index
    %c0_11 = arith.constant 0 : index
    %c0_12 = arith.constant 0 : index
    %14 = vector.load %arg7[%c0_9, %c0_10, %c0_11, %c0_12] : memref<1x1x8x128xf32, #tpu.memory_space<vmem>>, vector<1x1x8x128xf32>
    %15 = vector.shape_cast %10 : vector<8x128xf32> to vector<1x1x8x128xf32>
    %16 = arith.maximumf %14, %15 : vector<1x1x8x128xf32>
    %c0_13 = arith.constant 0 : index
    %c0_14 = arith.constant 0 : index
    %c0_15 = arith.constant 0 : index
    %c0_16 = arith.constant 0 : index
    %17 = vector.load %arg7[%c0_13, %c0_14, %c0_15, %c0_16] : memref<1x1x8x128xf32, #tpu.memory_space<vmem>>, vector<1x1x8x128xf32>
    tpu.vector_store %arg7[%c0_13, %c0_14, %c0_15, %c0_16], %16 {strides = array<i32>} : memref<1x1x8x128xf32, #tpu.memory_space<vmem>>, vector<1x1x8x128xf32>,
    %18 = arith.truncf %8 : vector<16x128xf32> to vector<16x128xbf16>
    %c0_17 = arith.constant 0 : index
    %c0_18 = arith.constant 0 : index
    %19 = vector.load %arg6[%c0_17, %c0_18] : memref<128x512xbf16, #tpu.memory_space<vmem>>, vector<128x512xbf16>
    %cst_19 = arith.constant dense<0.000000e+00> : vector<16x512xf32>
    %20 = tpu.matmul %18, %19, %cst_19 {dimension_numbers = #tpu.dot_dimension_numbers<[1], [0], [0], [1], [0, 0, 1, 1], [], []>} : vector<16x128xbf16>, vector<128x512xbf16>, vector<16x512xf32> -> vector<16x512xf32>
    %21 = arith.truncf %20 : vector<16x512xf32> to vector<16x512xbf16>
    %c0_20 = arith.constant 0 : index
    %c0_21 = arith.constant 0 : index
    %c0_22 = arith.constant 0 : index
    %22 = vector.load %arg8[%c0_20, %c0_21, %c0_22] : memref<1x16x512xbf16, #tpu.memory_space<vmem>>, vector<1x16x512xbf16>
    %23 = vector.shape_cast %22 : vector<1x16x512xbf16> to vector<16x512xbf16>
    %24 = vector.shape_cast %21 : vector<16x512xbf16> to vector<1x16x512xbf16>
    tpu.vector_store %arg8[%c0_20, %c0_21, %c0_22], %24 {strides = array<i32>} : memref<1x16x512xbf16, #tpu.memory_space<vmem>>, vector<1x16x512xbf16>,
    return
  }
  func.func @transform_0(%arg0: i32, %arg1: i32, %arg2: i32) -> (i32, i32, i32) {
    %c1_i32 = arith.constant 1 : i32
    %0 = arith.muli %arg1, %c1_i32 : i32
    %1 = arith.addi %0, %arg2 : i32
    %c0_i32 = arith.constant 0 : i32
    %c0_i32_0 = arith.constant 0 : i32
    return %arg0, %1, %c0_i32 : i32, i32, i32
  }
  func.func @transform_1(%arg0: i32, %arg1: i32, %arg2: i32) -> (i32, i32) {
    %c0_i32 = arith.constant 0 : i32
    %c0_i32_0 = arith.constant 0 : i32
    %c0_i32_1 = arith.constant 0 : i32
    return %c0_i32, %c0_i32_0 : i32, i32
  }
  func.func @transform_2(%arg0: i32, %arg1: i32, %arg2: i32) -> (i32, i32) {
    %c0_i32 = arith.constant 0 : i32
    %c0_i32_0 = arith.constant 0 : i32
    %c0_i32_1 = arith.constant 0 : i32
    return %c0_i32, %c0_i32_0 : i32, i32
  }
  func.func @transform_3(%arg0: i32, %arg1: i32, %arg2: i32) -> (i32, i32) {
    %c0_i32 = arith.constant 0 : i32
    %c0_i32_0 = arith.constant 0 : i32
    %c0_i32_1 = arith.constant 0 : i32
    return %c0_i32, %c0_i32_0 : i32, i32
  }
  func.func @transform_4(%arg0: i32, %arg1: i32, %arg2: i32) -> (i32, i32, i32, i32) {
    %c0_i32 = arith.constant 0 : i32
    %c0_i32_0 = arith.constant 0 : i32
    %c0_i32_1 = arith.constant 0 : i32
    return %arg0, %arg1, %c0_i32, %c0_i32_0 : i32, i32, i32, i32
  }
  func.func @transform_5(%arg0: i32, %arg1: i32, %arg2: i32) -> (i32, i32, i32) {
    %c1_i32 = arith.constant 1 : i32
    %0 = arith.muli %arg1, %c1_i32 : i32
    %1 = arith.addi %0, %arg2 : i32
    %c0_i32 = arith.constant 0 : i32
    %c0_i32_0 = arith.constant 0 : i32
    return %arg0, %1, %c0_i32 : i32, i32, i32
  }
}

</mosaic_0001>

<llo_original>
// kernel: tpu_custom_call.1
$region0: #{tpu_custom_call.1}
  #allocation0 [shape = 'u32[]', space=smem, size = 0x4, offset = 0x4, fixed_abs, tag = 'smem constant byte address 0x4 - core index']
  #allocation1 [shape = 'u32[144,128]{1,0:T(1,128)}', space=vmem, size = 0x12000, scoped, tag = 'internal scratch']
  %s0 = inlined_call_operand.vmem [shape: f32[2,16,8], index: 0, kind: input, shape index: {}]
  %s1 = inlined_call_operand.vmem [shape: f32[8,128], index: 1, kind: input, shape index: {}]
  %s2 = inlined_call_operand.vmem [shape: f32[1,128], index: 2, kind: input, shape index: {}]
  %s3 = inlined_call_operand.hbm [shape: bf16[128,512], index: 3, kind: input, shape index: {}]
  %s4 = inlined_call_operand.hbm [shape: f32[2,1,8,128], index: 4, kind: output, shape index: {0}]
  %s5 = inlined_call_operand.hbm [shape: bf16[2,16,512], index: 5, kind: output, shape index: {1}]
  %6 = xla_tuple %s4, %s5
  %s7 = sld [smem:[#allocation0]]
  $region65: #{tpu_custom_call.1} parent=0
    _
  %s9 = ssub.s32 1, %s7
  %s10 = scalar_select 0, %s9, %s7
  $region1: #{tpu_custom_call.1} parent=0
    #allocation2 [shape = 'u8[131072]{0}', space=vmem, size = 0x20000, scoped, tag = 'input window, operand 3, single buffered']
    #allocation3 [shape = 's32[2]{0}', space=sflag, size = 0x8, scoped, tag = 'scoped memory for tpu_custom_call.1']
    #allocation4 [shape = 's32[2]{0}', space=sflag, size = 0x8, scoped, tag = 'scoped memory for tpu_custom_call.1']
    #allocation5 [shape = 'u8[8192]{0}', space=vmem, size = 0x2000, scoped, tag = 'output window, operand 0']
    #allocation6 [shape = 'u8[32768]{0}', space=vmem, size = 0x8000, scoped, tag = 'output window, operand 1']
    #allocation7 [shape = 's32[2]{0}', space=sflag, size = 0x8, scoped, tag = 'scoped memory for tpu_custom_call.1']
    %11 = vsyncpa [#allocation3], 0
    %12 = vsyncpa [#allocation4], 0
    %s13 = scalar_lea.sflag [#allocation4], 1
    %14 = vsyncpa %s13, 0
    %15 = vsyncpa [#allocation7], 0
    %s16 = scalar_lea.sflag [#allocation7], 1
    %17 = vsyncpa %s16, 0
    loop: start=0, step=1, limit=4
    $region2: #{tpu_custom_call.1} parent=1 // loop_pre_header
      _
    $region3: #{tpu_custom_call.1} parent=1 // loop_header
      %s19 = sphi 0, %s23
      %p20 = scmp.ge.s32.totalorder %s19, 4
      %s26 = sphi 0, %s45
      %s27 = sphi 0, %s41
      %s28 = sphi 0, %s37
      %s29 = sphi 0, %s26
      %s30 = sphi 0, %s27
      %s31 = sphi 0, %s28
      %s32 = sphi 0, %s29
      %s33 = sphi 0, %s30
      %s34 = sphi 0, %s31
      %s52 = sphi 0, %s54
      %s55 = sphi 0, %s52
      %s56 = sphi 0, %s55
      %s72 = sphi 0, %s56
      %s76 = sphi 0, %s76
      %s78 = sphi 0, %s76
      %s79 = sphi 0, %s78
      %s93 = sphi 0, %s79
      %s97 = sphi 0, %s97
      %s99 = sphi 0, %s97
      %s100 = sphi 0, %s99
      %s114 = sphi 0, %s100
      %s118 = sphi 0, %s118
      %s120 = sphi 0, %s118
      %s121 = sphi 0, %s120
      %s135 = sphi 0, %s121
      %s143 = sphi 0, %s145
      %s146 = sphi 0, %s143
      %s147 = sphi 0, %s146
      %s163 = sphi 0, %s147
      %s173 = sphi 0, %s175
      %s176 = sphi 0, %s173
      %s177 = sphi 0, %s176
      %s193 = sphi 0, %s177
    $region4: #{tpu_custom_call.1} parent=1 // loop_header_branch
      %22 = sbr.rel (%p20) target = $region8
    $region5: #{tpu_custom_call.1} parent=1 // loop_body
      %s24 = ssub.s32 %s19, 1
      %s25 = ssub.s32 %s19, 2
      %s35 = sadd.s32 1, %s28
      %p36 = scmp.ge.s32.totalorder %s35, 1
      %s37 = scalar_select %p36, 0, %s35
      %s38 = sadd.s32 1, %s27
      %s39 = scalar_select %p36, %s38, %s27
      %p40 = scmp.ge.s32.totalorder %s39, 1
      %s41 = scalar_select %p40, 0, %s39
      %s42 = sadd.s32 1, %s26
      %s43 = scalar_select %p40, %s42, %s26
      %p44 = scmp.ge.s32.totalorder %s43, 2
      %s45 = scalar_select %p44, 0, %s43
      %s46 = sadd.s32 %s27, %s28
      %s47 = sadd.s32 %s41, %s37
      %s48 = ssub.s32 %s26, %s45
      %s49 = ssub.s32 %s46, %s47
      %s50 = sor.u32 %s48, %s49
      %p51 = scmp.eq.s32.totalorder %s50, 0
      %s53 = sadd.s32 %s52, 1
      %s54 = scalar_select %p51, %s52, %s53
      %p57 = pneg %p51
      %p58 = scmp.eq.s32.totalorder %s19, 1
      %p59 = por %p57, %p58
      %p60 = scmp.ne.s32.totalorder %s52, %s55
      %p61 = scmp.eq.s32.totalorder %s19, 0
      %p62 = por %p60, %p61
      %p63 = scmp.ne.s32.totalorder %s52, %s55
      %p64 = scmp.eq.s32.totalorder %s24, 1
      %p65 = por %p63, %p64
      %p66 = scmp.ne.s32.totalorder %s55, %s56
      %p67 = scmp.eq.s32.totalorder %s24, 0
      %p68 = por %p66, %p67
      %p69 = scmp.ne.s32.totalorder %s55, %s56
      %p70 = scmp.eq.s32.totalorder %s25, 1
      %p71 = por %p69, %p70
      %p73 = scmp.ne.s32.totalorder %s56, %s72
      %p74 = scmp.eq.s32.totalorder %s25, 0
      %p75 = por %p73, %p74
      %s77 = sadd.s32 %s76, 1
      %p80 = scmp.eq.s32.totalorder %s19, 1
      %p81 = scmp.ne.s32.totalorder %s76, %s78
      %p82 = scmp.eq.s32.totalorder %s19, 0
      %p83 = por %p81, %p82
      %p84 = scmp.ne.s32.totalorder %s76, %s78
      %p85 = scmp.eq.s32.totalorder %s24, 1
      %p86 = por %p84, %p85
      %p87 = scmp.ne.s32.totalorder %s78, %s79
      %p88 = scmp.eq.s32.totalorder %s24, 0
      %p89 = por %p87, %p88
      %p90 = scmp.ne.s32.totalorder %s78, %s79
      %p91 = scmp.eq.s32.totalorder %s25, 1
      %p92 = por %p90, %p91
      %p94 = scmp.ne.s32.totalorder %s79, %s93
      %p95 = scmp.eq.s32.totalorder %s25, 0
      %p96 = por %p94, %p95
      %s98 = sadd.s32 %s97, 1
      %p101 = scmp.eq.s32.totalorder %s19, 1
      %p102 = scmp.ne.s32.totalorder %s97, %s99
      %p103 = scmp.eq.s32.totalorder %s19, 0
      %p104 = por %p102, %p103
      %p105 = scmp.ne.s32.totalorder %s97, %s99
      %p106 = scmp.eq.s32.totalorder %s24, 1
      %p107 = por %p105, %p106
      %p108 = scmp.ne.s32.totalorder %s99, %s100
      %p109 = scmp.eq.s32.totalorder %s24, 0
      %p110 = por %p108, %p109
      %p111 = scmp.ne.s32.totalorder %s99, %s100
      %p112 = scmp.eq.s32.totalorder %s25, 1
      %p113 = por %p111, %p112
      %p115 = scmp.ne.s32.totalorder %s100, %s114
      %p116 = scmp.eq.s32.totalorder %s25, 0
      %p117 = por %p115, %p116
      %s119 = sadd.s32 %s118, 1
      %p122 = scmp.eq.s32.totalorder %s19, 1
      %p123 = scmp.ne.s32.totalorder %s118, %s120
      %p124 = scmp.eq.s32.totalorder %s19, 0
      %p125 = por %p123, %p124
      %p126 = scmp.ne.s32.totalorder %s118, %s120
      %p127 = scmp.eq.s32.totalorder %s24, 1
      %p128 = por %p126, %p127
      %p129 = scmp.ne.s32.totalorder %s120, %s121
      %p130 = scmp.eq.s32.totalorder %s24, 0
      %p131 = por %p129, %p130
      %p132 = scmp.ne.s32.totalorder %s120, %s121
      %p133 = scmp.eq.s32.totalorder %s25, 1
      %p134 = por %p132, %p133
      %p136 = scmp.ne.s32.totalorder %s121, %s135
      %p137 = scmp.eq.s32.totalorder %s25, 0
      %p138 = por %p136, %p137
      %s139 = ssub.s32 %s26, %s45
      %s140 = ssub.s32 %s27, %s41
      %s141 = sor.u32 %s139, %s140
      %p142 = scmp.eq.s32.totalorder %s141, 0
      %s144 = sadd.s32 %s143, 1
      %s145 = scalar_select %p142, %s143, %s144
      %p148 = pneg %p142
      %p149 = scmp.eq.s32.totalorder %s19, 1
      %p150 = por %p148, %p149
      %p151 = scmp.ne.s32.totalorder %s143, %s146
      %p152 = scmp.eq.s32.totalorder %s19, 0
      %p153 = por %p151, %p152
      %p154 = scmp.ne.s32.totalorder %s143, %s146
      %p155 = scmp.eq.s32.totalorder %s24, 1
      %p156 = por %p154, %p155
      %p157 = scmp.ne.s32.totalorder %s146, %s147
      %p158 = scmp.eq.s32.totalorder %s24, 0
      %p159 = por %p157, %p158
      %p160 = scmp.ne.s32.totalorder %s146, %s147
      %p161 = scmp.eq.s32.totalorder %s25, 1
      %p162 = por %p160, %p161
      %p164 = scmp.ne.s32.totalorder %s147, %s163
      %p165 = scmp.eq.s32.totalorder %s25, 0
      %p166 = por %p164, %p165
      %s167 = sadd.s32 %s27, %s28
      %s168 = sadd.s32 %s41, %s37
      %s169 = ssub.s32 %s26, %s45
      %s170 = ssub.s32 %s167, %s168
      %s171 = sor.u32 %s169, %s170
      %p172 = scmp.eq.s32.totalorder %s171, 0
      %s174 = sadd.s32 %s173, 1
      %s175 = scalar_select %p172, %s173, %s174
      %p178 = pneg %p172
      %p179 = scmp.eq.s32.totalorder %s19, 1
      %p180 = por %p178, %p179
      %p181 = scmp.ne.s32.totalorder %s173, %s176
      %p182 = scmp.eq.s32.totalorder %s19, 0
      %p183 = por %p181, %p182
      %p184 = scmp.ne.s32.totalorder %s173, %s176
      %p185 = scmp.eq.s32.totalorder %s24, 1
      %p186 = por %p184, %p185
      %p187 = scmp.ne.s32.totalorder %s176, %s177
      %p188 = scmp.eq.s32.totalorder %s24, 0
      %p189 = por %p187, %p188
      %p190 = scmp.ne.s32.totalorder %s176, %s177
      %p191 = scmp.eq.s32.totalorder %s25, 1
      %p192 = por %p190, %p191
      %p194 = scmp.ne.s32.totalorder %s177, %s193
      %p195 = scmp.eq.s32.totalorder %s25, 0
      %p196 = por %p194, %p195
      %p197 = scmp.le.s32.totalorder 1, %s19
      %p198 = scmp.lt.s32.totalorder %s19, 3
      %p199 = pnand %p197, %p198
      %p200 = pneg %p199
      // Predicated region
      $region9: #{tpu_custom_call.1} parent=5 // pred_check
        _
      $region10: #{tpu_custom_call.1} parent=5 // pred_check_branch
        %202 = sbr.rel (%p199) target = $region12
      $region11: #{tpu_custom_call.1} parent=5 // pred_region
        %s203 = ssub.s32 %s19, 1
        // Predicated region
        $region13: #{tpu_custom_call.1} parent=11 // pred_check
          %p204 = pneg %p89
        $region14: #{tpu_custom_call.1} parent=11 // pred_check_branch
          %206 = sbr.rel (%p204) target = $region16
        $region15: #{tpu_custom_call.1} parent=11 // pred_region
          _
        $region16: #{tpu_custom_call.1} parent=11 // pred_fallthru
          _
        // Predicated region
        $region17: #{tpu_custom_call.1} parent=11 // pred_check
          %p207 = pneg %p110
        $region18: #{tpu_custom_call.1} parent=11 // pred_check_branch
          %209 = sbr.rel (%p207) target = $region20
        $region19: #{tpu_custom_call.1} parent=11 // pred_region
          _
        $region20: #{tpu_custom_call.1} parent=11 // pred_fallthru
          _
        // Predicated region
        $region21: #{tpu_custom_call.1} parent=11 // pred_check
          %p210 = pneg %p131
        $region22: #{tpu_custom_call.1} parent=11 // pred_check_branch
          %212 = sbr.rel (%p210) target = $region24
        $region23: #{tpu_custom_call.1} parent=11 // pred_region
          %s214 = ssub.s32 4096, 4096
          %215 = vsyncadd [#allocation3], %s214
          %s216 = sshll.u32 [#allocation2], 4
          %s217 = int_to_ptr.vmem [resolvable:$true] %s216
          %222 = dma.hbm_to_vmem [thread:$0]  %s3, 4096, %s217, [#allocation3], 256, 256, 16
        $region24: #{tpu_custom_call.1} parent=11 // pred_fallthru
          _
      $region12: #{tpu_custom_call.1} parent=5 // pred_fallthru
        _
      %p223 = scmp.lt.s32.totalorder %s19, 2
      // Predicated region
      $region25: #{tpu_custom_call.1} parent=5 // pred_check
        %p224 = pneg %p223
      $region26: #{tpu_custom_call.1} parent=5 // pred_check_branch
        %226 = sbr.rel (%p224) target = $region28
      $region27: #{tpu_custom_call.1} parent=5 // pred_region
        // Predicated region
        $region29: #{tpu_custom_call.1} parent=27 // pred_check
          %p227 = pneg %p62
        $region30: #{tpu_custom_call.1} parent=27 // pred_check_branch
          %229 = sbr.rel (%p227) target = $region32
        $region31: #{tpu_custom_call.1} parent=27 // pred_region
          %s230 = sadd.s32 %s27, %s28
          %s231 = smul.u32 2, %s230
          %p232 = scmp.lt.s32.totalorder %s26, 1
          %s233 = scalar_select %p232, %s26, 1
          %p234 = scmp.lt.s32.totalorder %s231, 1
          %s235 = scalar_select %p234, %s231, 1
          %s236 = smul.addr %s233, 2
          %s237 = sadd.s32 %s235, %s236
          %s238 = smul.addr %s237, 8
          %s239 = scalar_lea.vmem %s0, %s238
          %s240 = sadd.s32 %s27, %s28
          %s241 = smul.u32 2, %s240
        $region32: #{tpu_custom_call.1} parent=27 // pred_fallthru
          _
      $region28: #{tpu_custom_call.1} parent=5 // pred_fallthru
        _
      %p242 = scmp.le.s32.totalorder 1, %s19
      %p243 = scmp.lt.s32.totalorder %s19, 3
      %p244 = pnand %p242, %p243
      %p245 = pneg %p244
      // Predicated region
      $region33: #{tpu_custom_call.1} parent=5 // pred_check
        _
      $region34: #{tpu_custom_call.1} parent=5 // pred_check_branch
        %247 = sbr.rel (%p244) target = $region36
      $region35: #{tpu_custom_call.1} parent=5 // pred_region
        %s248 = ssub.s32 %s19, 1
        // Predicated region
        $region37: #{tpu_custom_call.1} parent=35 // pred_check
          %p249 = pneg %p131
        $region38: #{tpu_custom_call.1} parent=35 // pred_check_branch
          %251 = sbr.rel (%p249) target = $region40
        $region39: #{tpu_custom_call.1} parent=35 // pred_region
          %252 = dma.done [#allocation3], 4096
        $region40: #{tpu_custom_call.1} parent=35 // pred_fallthru
          _
        %s253 = sadd.s32 %s30, %s31
        %s254 = smul.u32 2, %s253
        %p255 = scmp.lt.s32.totalorder %s29, 1
        %s256 = scalar_select %p255, %s29, 1
        %p257 = scmp.lt.s32.totalorder %s254, 1
        %s258 = scalar_select %p257, %s254, 1
        %s259 = smul.addr %s256, 2
        %s260 = sadd.s32 %s258, %s259
        %s261 = smul.addr %s260, 8
        %s262 = scalar_lea.vmem %s0, %s261
        %p263 = pneg %p68
        %p264 = pneg %p65
        %p265 = pneg %p89
        %p266 = pneg %p86
        %p267 = pneg %p110
        %p268 = pneg %p107
        %p269 = pneg %p131
        %p270 = pneg %p128
        %p271 = pneg %p159
        %p272 = pneg %p156
        %s273 = sand.u32 %s146, 1
        %s274 = scalar_lea.sflag [#allocation4], %s273
        %s275 = sand.u32 %s146, 1
        %s276 = smul.addr %s275, 8
        %s277 = scalar_lea.vmem [#allocation5], %s276
        %p278 = pneg %p189
        %p279 = pneg %p186
        %s280 = sand.u32 %s176, 1
        %s281 = scalar_lea.sflag [#allocation7], %s280
        %s282 = sand.u32 %s176, 1
        %s283 = smul.addr %s282, 32
        %s284 = scalar_lea.vmem [#allocation6], %s283
        %s285 = sadd.s32 %s30, %s31
        %s286 = smul.u32 2, %s285
        %p287 = scmp.lt.s32.totalorder %s29, 1
        %s288 = scalar_select %p287, %s29, 1
        %p289 = scmp.lt.s32.totalorder %s286, 1
        %s290 = scalar_select %p289, %s286, 1
        %s291 = smul.addr %s288, 2
        %s292 = sadd.s32 %s290, %s291
        %s293 = smul.addr %s292, 8
        %s294 = scalar_lea.vmem %s0, %s293
        %s295 = sadd.s32 %s30, %s31
        %s296 = smul.u32 2, %s295
        %s297 = sadd.s32 %s30, %s31
        %s298 = smul.u32 2, %s297
        %v300 = vld [vmem:[%s294] sm:$0xff]
        %v301 = vld [vmem:[%s294 + $0x8] sm:$0xff]
        %v302 = vld [vmem:[%s1] sm:$0xff]
        %v303 = vld [vmem:[%s2] sm:$0x1]
        %v305 = vlaneseq
        %v306 = vshrl.u32 %v305, 7
        %v307 = vsub.s32 0, %v306
        %v308 = vrot.slane %v303, %v307
        %vm310 = vcmask 64512
        %v312 = vsel %vm310, %v300, 0
        %v315 = vsel %vm310, %v301, 0
        %317 = vmatprep.subr.mxu0 0.0
        %318 = vmatpush1.msra.mxu0 %v302
        %319 = vmatprep.subr.mxu0 0.0
        %320 = vmatpush1.msra.mxu0 0.0
        %321 = vmatprep.subr.mxu0 0.0
        %322 = vmatpush1.msra.mxu0 0.0
        %323 = vmatprep.subr.mxu0 0.0
        %324 = vmatpush1.msra.mxu0 0.0
        %325 = vmatprep.subr.mxu0 0.0
        %326 = vmatpush1.msra.mxu0 0.0
        %327 = vmatprep.subr.mxu0 0.0
        %328 = vmatpush1.msra.mxu0 0.0
        %329 = vmatprep.subr.mxu0 0.0
        %330 = vmatpush1.msra.mxu0 0.0
        %331 = vmatprep.subr.mxu0 0.0
        %332 = vmatpush1.msra.mxu0 0.0
        %333 = vmatprep.subr.mxu0 0.0
        %334 = vmatpush1.msra.mxu0 0.0
        %335 = vmatprep.subr.mxu0 0.0
        %336 = vmatpush1.msra.mxu0 0.0
        %337 = vmatprep.subr.mxu0 0.0
        %338 = vmatpush1.msra.mxu0 0.0
        %339 = vmatprep.subr.mxu0 0.0
        %340 = vmatpush1.msra.mxu0 0.0
        %341 = vmatprep.subr.mxu0 0.0
        %342 = vmatpush1.msra.mxu0 0.0
        %343 = vmatprep.subr.mxu0 0.0
        %344 = vmatpush1.msra.mxu0 0.0
        %345 = vmatprep.subr.mxu0 0.0
        %346 = vmatpush1.msra.mxu0 0.0
        %347 = vmatprep.subr.mxu0 0.0
        %348 = vmatpush1.msra.mxu0 0.0
        %349 = vmatprep.subr.mxu0 0.0
        %350 = vmatpush1.msra.mxu0 0.0
        %351 = vmatprep.subr.mxu0 0.0
        %352 = vmatpush1.msra.mxu0 0.0
        %353 = vmatprep.subr.mxu0 0.0
        %354 = vmatpush1.msra.mxu0 0.0
        %355 = vmatprep.subr.mxu0 0.0
        %356 = vmatpush1.msra.mxu0 0.0
        %357 = vmatprep.subr.mxu0 0.0
        %358 = vmatpush1.msra.mxu0 0.0
        %359 = vmatprep.subr.mxu0 0.0
        %360 = vmatpush1.msra.mxu0 0.0
        %361 = vmatprep.subr.mxu0 0.0
        %362 = vmatpush1.msra.mxu0 0.0
        %363 = vmatprep.subr.mxu0 0.0
        %364 = vmatpush1.msra.mxu0 0.0
        %365 = vmatprep.subr.mxu0 0.0
        %366 = vmatpush1.msra.mxu0 0.0
        %367 = vmatprep.subr.mxu0 0.0
        %368 = vmatpush1.msra.mxu0 0.0
        %369 = vmatprep.subr.mxu0 0.0
        %370 = vmatpush1.msra.mxu0 0.0
        %371 = vmatprep.subr.mxu0 0.0
        %372 = vmatpush1.msra.mxu0 0.0
        %373 = vmatprep.subr.mxu0 0.0
        %374 = vmatpush1.msra.mxu0 0.0
        %375 = vmatprep.subr.mxu0 0.0
        %376 = vmatpush1.msra.mxu0 0.0
        %377 = vmatprep.subr.mxu0 0.0
        %378 = vmatpush1.msra.mxu0 0.0
        %379 = vmatprep.subr.mxu0 0.0
        %380 = vmatpush1.msra.mxu0 0.0
        %381 = vmatprep.mubr.f32.mxu0 0.0
        %382 = vmatmul.mubr.f32.gmra.mrb[0].mxu0 %v312
        %v383 = vpop.f32.mrb[0].mxu0
        %v384 = vadd.f32 %v308, %v383
        %v385 = vpop.f32.mrb[0].mxu0
        %386 = vmatprep.mubr.f32.mxu0 0.0
        %387 = vmatmul.mubr.f32.gmra.mrb[0].mxu0 %v315
        %v388 = vpop.f32.mrb[0].mxu0
        %v389 = vadd.f32 %v308, %v388
        %v390 = vpop.f32.mrb[0].mxu0
        %391 = vdwg.mxu0
        %v392 = vmax.f32 %v384, 0.0
        %v393 = vmax.f32 %v389, 0.0
        %v394 = vmax.f32 %v392, %v393
        %p395 = scmp.eq.s32.totalorder %s31, 0
        // Predicated region
        $region41: #{tpu_custom_call.1} parent=35 // pred_check
          %p396 = pneg %p395
        $region42: #{tpu_custom_call.1} parent=35 // pred_check_branch
          %398 = sbr.rel (%p396) target = $region44
        $region43: #{tpu_custom_call.1} parent=35 // pred_region
          %399 = vst [vmem:[%s277] sm:$0xff] 0.0
        $region44: #{tpu_custom_call.1} parent=35 // pred_fallthru
          _
        %v400 = vld [vmem:[%s277] sm:$0xff]
        %v401 = vmax.f32 %v400, %v394
        %402 = vst [vmem:[%s277] sm:$0xff] %v401
        %v403 = vpack.c.bf16 %v393, %v392
        %v404 = vld [vmem:[#allocation2] sm:$0xff]
        %v405 = vld [vmem:[#allocation2 + $0x8] sm:$0xff]
        %v406 = vld [vmem:[#allocation2 + $0x10] sm:$0xff]
        %v407 = vld [vmem:[#allocation2 + $0x18] sm:$0xff]
        %v408 = vld [vmem:[#allocation2 + $0x20] sm:$0xff]
        %v409 = vld [vmem:[#allocation2 + $0x28] sm:$0xff]
        %v410 = vld [vmem:[#allocation2 + $0x30] sm:$0xff]
        %v411 = vld [vmem:[#allocation2 + $0x38] sm:$0xff]
        %v412 = vld [vmem:[#allocation2 + $0x40] sm:$0xff]
        %v413 = vld [vmem:[#allocation2 + $0x48] sm:$0xff]
        %v414 = vld [vmem:[#allocation2 + $0x50] sm:$0xff]
        %v415 = vld [vmem:[#allocation2 + $0x58] sm:$0xff]
        %v416 = vld [vmem:[#allocation2 + $0x60] sm:$0xff]
        %v417 = vld [vmem:[#allocation2 + $0x68] sm:$0xff]
        %v418 = vld [vmem:[#allocation2 + $0x70] sm:$0xff]
        %v419 = vld [vmem:[#allocation2 + $0x78] sm:$0xff]
        %v420 = vld [vmem:[#allocation2 + $0x80] sm:$0xff]
        %v421 = vld [vmem:[#allocation2 + $0x88] sm:$0xff]
        %v422 = vld [vmem:[#allocation2 + $0x90] sm:$0xff]
        %v423 = vld [vmem:[#allocation2 + $0x98] sm:$0xff]
        %v424 = vld [vmem:[#allocation2 + $0xa0] sm:$0xff]
        %v425 = vld [vmem:[#allocation2 + $0xa8] sm:$0xff]
        %v426 = vld [vmem:[#allocation2 + $0xb0] sm:$0xff]
        %v427 = vld [vmem:[#allocation2 + $0xb8] sm:$0xff]
        %v428 = vld [vmem:[#allocation2 + $0xc0] sm:$0xff]
        %v429 = vld [vmem:[#allocation2 + $0xc8] sm:$0xff]
        %v430 = vld [vmem:[#allocation2 + $0xd0] sm:$0xff]
        %v431 = vld [vmem:[#allocation2 + $0xd8] sm:$0xff]
        %v432 = vld [vmem:[#allocation2 + $0xe0] sm:$0xff]
        %v433 = vld [vmem:[#allocation2 + $0xe8] sm:$0xff]
        %v434 = vld [vmem:[#allocation2 + $0xf0] sm:$0xff]
        %v435 = vld [vmem:[#allocation2 + $0xf8] sm:$0xff]
        %v468 = vunpack.c.l.b16 %v404
        %v469 = vunpack.c.h.b16 %v404
        %v470 = vunpack.c.l.b16 %v405
        %v471 = vunpack.c.h.b16 %v405
        %v472 = vunpack.c.l.b16 %v406
        %v473 = vunpack.c.h.b16 %v406
        %v474 = vunpack.c.l.b16 %v407
        %v475 = vunpack.c.h.b16 %v407
        %v476 = vunpack.c.l.b16 %v408
        %v477 = vunpack.c.h.b16 %v408
        %v478 = vunpack.c.l.b16 %v409
        %v479 = vunpack.c.h.b16 %v409
        %v480 = vunpack.c.l.b16 %v410
        %v481 = vunpack.c.h.b16 %v410
        %v482 = vunpack.c.l.b16 %v411
        %v483 = vunpack.c.h.b16 %v411
        %v484 = vunpack.c.l.b16 %v412
        %v485 = vunpack.c.h.b16 %v412
        %v486 = vunpack.c.l.b16 %v413
        %v487 = vunpack.c.h.b16 %v413
        %v488 = vunpack.c.l.b16 %v414
        %v489 = vunpack.c.h.b16 %v414
        %v490 = vunpack.c.l.b16 %v415
        %v491 = vunpack.c.h.b16 %v415
        %v492 = vunpack.c.l.b16 %v416
        %v493 = vunpack.c.h.b16 %v416
        %v494 = vunpack.c.l.b16 %v417
        %v495 = vunpack.c.h.b16 %v417
        %v496 = vunpack.c.l.b16 %v418
        %v497 = vunpack.c.h.b16 %v418
        %v498 = vunpack.c.l.b16 %v419
        %v499 = vunpack.c.h.b16 %v419
        %v500 = vunpack.c.l.b16 %v420
        %v501 = vunpack.c.h.b16 %v420
        %v502 = vunpack.c.l.b16 %v421
        %v503 = vunpack.c.h.b16 %v421
        %v504 = vunpack.c.l.b16 %v422
        %v505 = vunpack.c.h.b16 %v422
        %v506 = vunpack.c.l.b16 %v423
        %v507 = vunpack.c.h.b16 %v423
        %v508 = vunpack.c.l.b16 %v424
        %v509 = vunpack.c.h.b16 %v424
        %v510 = vunpack.c.l.b16 %v425
        %v511 = vunpack.c.h.b16 %v425
        %v512 = vunpack.c.l.b16 %v426
        %v513 = vunpack.c.h.b16 %v426
        %v514 = vunpack.c.l.b16 %v427
        %v515 = vunpack.c.h.b16 %v427
        %v516 = vunpack.c.l.b16 %v428
        %v517 = vunpack.c.h.b16 %v428
        %v518 = vunpack.c.l.b16 %v429
        %v519 = vunpack.c.h.b16 %v429
        %v520 = vunpack.c.l.b16 %v430
        %v521 = vunpack.c.h.b16 %v430
        %v522 = vunpack.c.l.b16 %v431
        %v523 = vunpack.c.h.b16 %v431
        %v524 = vunpack.c.l.b16 %v432
        %v525 = vunpack.c.h.b16 %v432
        %v526 = vunpack.c.l.b16 %v433
        %v527 = vunpack.c.h.b16 %v433
        %v528 = vunpack.c.l.b16 %v434
        %v529 = vunpack.c.h.b16 %v434
        %v530 = vunpack.c.l.b16 %v435
        %v531 = vunpack.c.h.b16 %v435
        %v532 = vpack.c.b16 %v472, %v468
        %v533 = vpack.c.b16 %v473, %v469
        %v534 = vpack.c.b16 %v474, %v470
        %v535 = vpack.c.b16 %v475, %v471
        %v536 = vpack.c.b16 %v480, %v476
        %v537 = vpack.c.b16 %v481, %v477
        %v538 = vpack.c.b16 %v482, %v478
        %v539 = vpack.c.b16 %v483, %v479
        %v540 = vpack.c.b16 %v488, %v484
        %v541 = vpack.c.b16 %v489, %v485
        %v542 = vpack.c.b16 %v490, %v486
        %v543 = vpack.c.b16 %v491, %v487
        %v544 = vpack.c.b16 %v496, %v492
        %v545 = vpack.c.b16 %v497, %v493
        %v546 = vpack.c.b16 %v498, %v494
        %v547 = vpack.c.b16 %v499, %v495
        %v548 = vpack.c.b16 %v504, %v500
        %v549 = vpack.c.b16 %v505, %v501
        %v550 = vpack.c.b16 %v506, %v502
        %v551 = vpack.c.b16 %v507, %v503
        %v552 = vpack.c.b16 %v512, %v508
        %v553 = vpack.c.b16 %v513, %v509
        %v554 = vpack.c.b16 %v514, %v510
        %v555 = vpack.c.b16 %v515, %v511
        %v556 = vpack.c.b16 %v520, %v516
        %v557 = vpack.c.b16 %v521, %v517
        %v558 = vpack.c.b16 %v522, %v518
        %v559 = vpack.c.b16 %v523, %v519
        %v560 = vpack.c.b16 %v528, %v524
        %v561 = vpack.c.b16 %v529, %v525
        %v562 = vpack.c.b16 %v530, %v526
        %v563 = vpack.c.b16 %v531, %v527
        %596 = vmatprep.subr.bf16.mxu0 %v533
        %597 = vmatpush1.bf16.msra.mxu0 %v532
        %598 = vmatprep.subr.bf16.mxu0 %v537
        %599 = vmatpush1.bf16.msra.mxu0 %v536
        %600 = vmatprep.subr.bf16.mxu0 %v541
        %601 = vmatpush1.bf16.msra.mxu0 %v540
        %602 = vmatprep.subr.bf16.mxu0 %v545
        %603 = vmatpush1.bf16.msra.mxu0 %v544
        %604 = vmatprep.subr.bf16.mxu0 %v549
        %605 = vmatpush1.bf16.msra.mxu0 %v548
        %606 = vmatprep.subr.bf16.mxu0 %v553
        %607 = vmatpush1.bf16.msra.mxu0 %v552
        %608 = vmatprep.subr.bf16.mxu0 %v557
        %609 = vmatpush1.bf16.msra.mxu0 %v556
        %610 = vmatprep.subr.bf16.mxu0 %v561
        %611 = vmatpush1.bf16.msra.mxu0 %v560
        %612 = vmatprep.subr.bf16.mxu0 0
        %613 = vmatpush1.bf16.msra.mxu0 0
        %614 = vmatprep.subr.bf16.mxu0 0
        %615 = vmatpush1.bf16.msra.mxu0 0
        %616 = vmatprep.subr.bf16.mxu0 0
        %617 = vmatpush1.bf16.msra.mxu0 0
        %618 = vmatprep.subr.bf16.mxu0 0
        %619 = vmatpush1.bf16.msra.mxu0 0
        %620 = vmatprep.subr.bf16.mxu0 0
        %621 = vmatpush1.bf16.msra.mxu0 0
        %622 = vmatprep.subr.bf16.mxu0 0
        %623 = vmatpush1.bf16.msra.mxu0 0
        %624 = vmatprep.subr.bf16.mxu0 0
        %625 = vmatpush1.bf16.msra.mxu0 0
        %626 = vmatprep.subr.bf16.mxu0 0
        %627 = vmatpush1.bf16.msra.mxu0 0
        %628 = vmatprep.mubr.bf16.mxu0 0
        %629 = vmatmul.mubr.bf16.gmra.mrb[0].mxu0 %v403
        %v630 = vpop.f32.mrb[0].mxu0
        %v631 = vadd.f32 0.0, %v630
        %v632 = vpop.f32.mrb[0].mxu0
        %v633 = vadd.f32 0.0, %v632
        %v634 = vpop.f32.mrb[0].mxu0
        %v635 = vadd.f32 0.0, %v634
        %v636 = vpop.f32.mrb[0].mxu0
        %v637 = vadd.f32 0.0, %v636
        %638 = vdwg.mxu0
        %639 = vmatprep.subr.bf16.mxu0 %v535
        %640 = vmatpush1.bf16.msra.mxu0 %v534
        %641 = vmatprep.subr.bf16.mxu0 %v539
        %642 = vmatpush1.bf16.msra.mxu0 %v538
        %643 = vmatprep.subr.bf16.mxu0 %v543
        %644 = vmatpush1.bf16.msra.mxu0 %v542
        %645 = vmatprep.subr.bf16.mxu0 %v547
        %646 = vmatpush1.bf16.msra.mxu0 %v546
        %647 = vmatprep.subr.bf16.mxu0 %v551
        %648 = vmatpush1.bf16.msra.mxu0 %v550
        %649 = vmatprep.subr.bf16.mxu0 %v555
        %650 = vmatpush1.bf16.msra.mxu0 %v554
        %651 = vmatprep.subr.bf16.mxu0 %v559
        %652 = vmatpush1.bf16.msra.mxu0 %v558
        %653 = vmatprep.subr.bf16.mxu0 %v563
        %654 = vmatpush1.bf16.msra.mxu0 %v562
        %655 = vmatprep.subr.bf16.mxu0 0
        %656 = vmatpush1.bf16.msra.mxu0 0
        %657 = vmatprep.subr.bf16.mxu0 0
        %658 = vmatpush1.bf16.msra.mxu0 0
        %659 = vmatprep.subr.bf16.mxu0 0
        %660 = vmatpush1.bf16.msra.mxu0 0
        %661 = vmatprep.subr.bf16.mxu0 0
        %662 = vmatpush1.bf16.msra.mxu0 0
        %663 = vmatprep.subr.bf16.mxu0 0
        %664 = vmatpush1.bf16.msra.mxu0 0
        %665 = vmatprep.subr.bf16.mxu0 0
        %666 = vmatpush1.bf16.msra.mxu0 0
        %667 = vmatprep.subr.bf16.mxu0 0
        %668 = vmatpush1.bf16.msra.mxu0 0
        %669 = vmatprep.subr.bf16.mxu0 0
        %670 = vmatpush1.bf16.msra.mxu0 0
        %671 = vmatprep.mubr.bf16.mxu0 0
        %672 = vmatmul.mubr.bf16.gmra.mrb[0].mxu0 %v403
        %v673 = vpop.f32.mrb[0].mxu0
        %v674 = vadd.f32 0.0, %v673
        %v675 = vpop.f32.mrb[0].mxu0
        %v676 = vadd.f32 0.0, %v675
        %v677 = vpop.f32.mrb[0].mxu0
        %v678 = vadd.f32 0.0, %v677
        %v679 = vpop.f32.mrb[0].mxu0
        %v680 = vadd.f32 0.0, %v679
        %681 = vdwg.mxu0
        %v682 = vpack.c.bf16 %v635, %v631
        %v683 = vpack.c.bf16 %v637, %v633
        %v684 = vpack.c.bf16 %v678, %v674
        %v685 = vpack.c.bf16 %v680, %v676
        %v690 = vunpack.c.l.b16 %v682
        %v691 = vunpack.c.l.b16 %v683
        %v692 = vunpack.c.l.b16 %v684
        %v693 = vunpack.c.l.b16 %v685
        %v694 = vunpack.c.h.b16 %v682
        %v695 = vunpack.c.h.b16 %v683
        %v696 = vunpack.c.h.b16 %v684
        %v697 = vunpack.c.h.b16 %v685
        %v698 = vpack.c.b16 %v691, %v690
        %v699 = vpack.c.b16 %v693, %v692
        %v700 = vpack.c.b16 %v695, %v694
        %v701 = vpack.c.b16 %v697, %v696
        %706 = vst [vmem:[%s284] sm:$0xff] %v698
        %707 = vst [vmem:[%s284 + $0x8] sm:$0xff] %v699
        %708 = vst [vmem:[%s284 + $0x10] sm:$0xff] %v700
        %709 = vst [vmem:[%s284 + $0x18] sm:$0xff] %v701
        %s710 = sand.u32 %s146, 1
        %s711 = scalar_lea.sflag [#allocation4], %s710
        %s712 = sand.u32 %s146, 1
        %s713 = smul.addr %s712, 8
        %s714 = scalar_lea.vmem [#allocation5], %s713
        %s715 = sand.u32 %s176, 1
        %s716 = scalar_lea.sflag [#allocation7], %s715
        %s717 = sand.u32 %s176, 1
        %s718 = smul.addr %s717, 32
        %s719 = scalar_lea.vmem [#allocation6], %s718
        // Predicated region
        $region45: #{tpu_custom_call.1} parent=35 // pred_check
          %p720 = pneg %p156
        $region46: #{tpu_custom_call.1} parent=35 // pred_check_branch
          %722 = sbr.rel (%p720) target = $region48
        $region47: #{tpu_custom_call.1} parent=35 // pred_region
          %s724 = ssub.s32 128, 128
          %725 = vsyncadd %s711, %s724
          %s726 = sadd.s32 %s30, %s29
          %s727 = smul.addr %s726, 128
          %s728 = scalar_lea.hbm %s4, %s727
          %s730 = sshll.u32 %s714, 4
          %s731 = int_to_ptr.vmem [resolvable:$true] %s730
          %733 = dma.vmem_to_hbm [thread:$0]  %s731, 128, %s728, %s711
        $region48: #{tpu_custom_call.1} parent=35 // pred_fallthru
          _
        // Predicated region
        $region49: #{tpu_custom_call.1} parent=35 // pred_check
          %p734 = pneg %p186
        $region50: #{tpu_custom_call.1} parent=35 // pred_check_branch
          %736 = sbr.rel (%p734) target = $region52
        $region51: #{tpu_custom_call.1} parent=35 // pred_region
          %s737 = sadd.s32 %s30, %s31
          %s738 = smul.u32 2, %s737
          %s740 = ssub.s32 512, 512
          %741 = vsyncadd %s716, %s740
          %s742 = smul.addr %s738, 4
          %s743 = smul.addr %s29, 8
          %s744 = sadd.s32 %s742, %s743
          %s745 = smul.addr %s744, 64
          %s746 = scalar_lea.hbm %s5, %s745
          %s747 = sshll.u32 %s719, 4
          %s748 = int_to_ptr.vmem [resolvable:$true] %s747
          %753 = dma.vmem_to_hbm [thread:$0]  %s748, 512, %s746, %s716, 256, 256, 16
        $region52: #{tpu_custom_call.1} parent=35 // pred_fallthru
          _
      $region36: #{tpu_custom_call.1} parent=5 // pred_fallthru
        _
      %p754 = scmp.le.s32.totalorder 2, %s19
      // Predicated region
      $region53: #{tpu_custom_call.1} parent=5 // pred_check
        %p755 = pneg %p754
      $region54: #{tpu_custom_call.1} parent=5 // pred_check_branch
        %757 = sbr.rel (%p755) target = $region56
      $region55: #{tpu_custom_call.1} parent=5 // pred_region
        %s758 = ssub.s32 %s19, 2
        // Predicated region
        $region57: #{tpu_custom_call.1} parent=55 // pred_check
          %p759 = pneg %p162
        $region58: #{tpu_custom_call.1} parent=55 // pred_check_branch
          %761 = sbr.rel (%p759) target = $region60
        $region59: #{tpu_custom_call.1} parent=55 // pred_region
          %s762 = sand.u32 %s147, 1
          %s763 = scalar_lea.sflag [#allocation4], %s762
          %s764 = sand.u32 %s147, 1
          %s765 = smul.addr %s764, 8
          %s766 = scalar_lea.vmem [#allocation5], %s765
          %767 = dma.done %s763, 128
        $region60: #{tpu_custom_call.1} parent=55 // pred_fallthru
          _
        // Predicated region
        $region61: #{tpu_custom_call.1} parent=55 // pred_check
          %p768 = pneg %p192
        $region62: #{tpu_custom_call.1} parent=55 // pred_check_branch
          %770 = sbr.rel (%p768) target = $region64
        $region63: #{tpu_custom_call.1} parent=55 // pred_region
          %s771 = sand.u32 %s177, 1
          %s772 = scalar_lea.sflag [#allocation7], %s771
          %s773 = sand.u32 %s177, 1
          %s774 = smul.addr %s773, 32
          %s775 = scalar_lea.vmem [#allocation6], %s774
          %776 = dma.done %s772, 512
        $region64: #{tpu_custom_call.1} parent=55 // pred_fallthru
          _
      $region56: #{tpu_custom_call.1} parent=5 // pred_fallthru
        _
    $region6: #{tpu_custom_call.1} parent=1 // loop_footer
      %s23 = sadd.s32 1, %s19
    $region7: #{tpu_custom_call.1} parent=1 // loop_footer_branch
      %18 = sbr.rel target = $region3
    $region8: #{tpu_custom_call.1} parent=1 // loop_exit
      _
    %777 = vsyncpa [#allocation3], 1
    %s778 = scalar_lea.sflag [#allocation3], 1
    %779 = vsyncpa %s778, 1
    %780 = vsyncpa [#allocation4], 1
    %s781 = scalar_lea.sflag [#allocation4], 1
    %782 = vsyncpa %s781, 1
    %783 = vsyncpa [#allocation7], 1
    %s784 = scalar_lea.sflag [#allocation7], 1
    %785 = vsyncpa %s784, 1

</llo_original>
